<compile_context>
chip_gen: v7x
topology: tpu7x:2x2x1
jax: 0.10.0
libtpu: 0.0.40
codegen_flags: <defaults>
</compile_context>

<pallas_src>
import math

import jax
import jax.numpy as jnp
from jax.experimental import pallas as pl
from jax.experimental.pallas import tpu as pltpu
from jax.scipy.linalg import block_diag

P = 128           # lane width of every padded row / weight
WS = 32           # sublanes per fused weight slot (all true in_dims <= 32)
NW = 11           # number of fused weight matrices
NB_ROWS = 8       # bias-slab sublanes (only 5 explicit-bias layers remain)
ONES_LANE = 31    # activation lane carrying the constant 1.0 used for bias folding

STATE_DIM = 19    # lidar dim 16 (8 LocalNotion blocks) + odom dim 3
ACTION_DIM = 4
F4 = 16           # LocalNotion output dim
G1, G2, G3, HH = 32, 16, 8, 16

# fused-weight slots inside the weight slab
I_B1, I_B2, I_L1, I_L2, I_L3, I_L4, I_N1, I_N2, I_LSTM, I_H1, I_H2 = range(NW)
# bias-slab rows for the layers whose bias could NOT be folded into the matmul
B_L1, B_L2, B_N2, B_LSTM, B_H1 = range(5)


# ----------------------------------- kernel -----------------------------------
def actor_critic_kernel(st_ref, w_ref, b_ref, out_ref):
    def dense(x, i, brow=None, relu=True):
        w = w_ref[i * WS:(i + 1) * WS, :]                       # (32, 128) static slice
        y = jnp.dot(x[:, :WS], w, preferred_element_type=jnp.float32)
        if brow is not None:                                    # explicit bias (in_dim==32)
            y = y + b_ref[brow:brow + 1, :]
        return jnp.maximum(y, 0.0) if relu else y

    lidar = st_ref[0:1, :]        # lanes 0..15, lane 31 == 1.0 (bias-fold seed)
    odom = st_ref[1:2, :]         # lanes 16..18 (pre-shifted on host)
    hprev = st_ref[2:3, :]        # lanes 0..15 (zero elsewhere)
    cprev = st_ref[3:4, :]        # lanes 0..15 (zero elsewhere)

    # LocalNotion: 8 per-pair Blocks folded into two block-diagonal matmuls + its MLP.
    z = dense(lidar, I_B1)                     # bias folded, emits 1.0 @ lane 31
    z = dense(z, I_B2)                         # bias folded
    z = dense(z, I_L1, brow=B_L1)              # explicit (all 32 lanes in use)
    z = dense(z, I_L2, brow=B_L2)              # explicit, bias row emits 1.0 @ lane 31
    z = dense(z, I_L3)                         # bias folded, emits 1.0 @ lane 31
    h = dense(z, I_L4)                         # bias folded, emits 1.0 @ lane 31

    # trunk: net(cat(h, o_odom)) as one matmul (odom already at lanes 16..18).
    n = dense(h + odom, I_N1)                  # bias folded
    net_out = dense(n, I_N2, brow=B_N2)        # explicit; lanes 16..127 stay zero

    # LSTMCell: ONE matmul on [net_out || h_prev]; gates i,f,g,o at lanes 0/16/32/48.
    # i/f/o columns of the weight & bias were pre-scaled by 0.5 at pack time, so
    # sigmoid(x) = 0.5*(1 + tanh(x/2)) costs a single tanh pass here.
    cat_xh = net_out + pltpu.roll(hprev, shift=HH, axis=1)      # lanes 0..31 valid
    gates = dense(cat_xh, I_LSTM, brow=B_LSTM, relu=False)
    lane = jax.lax.broadcasted_iota(jnp.int32, (1, P), 1)
    is_g = jnp.logical_and(lane >= 2 * HH, lane < 3 * HH)
    t = jnp.tanh(gates)                                         # single EUP pass
    act = jnp.where(is_g, t, 0.5 * t + 0.5)                     # sigmoid via tanh identity
    i_g = act
    f_g = pltpu.roll(act, shift=P - HH, axis=1)                 # XLU lane rotations
    g_g = pltpu.roll(act, shift=P - 2 * HH, axis=1)
    o_g = pltpu.roll(act, shift=P - 3 * HH, axis=1)
    keep = lane < HH                                            # mask padded lanes
    c_new = jnp.where(keep, f_g * cprev + i_g * g_g, 0.0)
    h_new = jnp.where(keep, o_g * jnp.tanh(c_new), 0.0)

    # heads: fused first layers (16 -> 8|8|8 lanes, explicit bias + 1.0 feed),
    # block-diagonal second layers with folded bias
    # (-> lane 0..3 actor logits, lane 4 critic_int, lane 5 critic_ext).
    t1 = dense(h_new, I_H1, brow=B_H1)
    heads = dense(t1, I_H2, relu=False)

    # nn.Softmax(0) on a (1, action_dim) row is identically 1.0 (spec-literal);
    # skip the dead exp/max/sum and emit the constant.
    probs = jnp.ones((1, P), jnp.float32)

    # single full (8,128) store: probs / raw heads / h_new / c_new / net_out / zeros.
    out_ref[...] = jnp.concatenate(
        [probs, heads, h_new, c_new, net_out, jnp.zeros((3, P), jnp.float32)], axis=0)


# --------------------------- one-time parameter packing ---------------------------
def pack_params(params):
    """Fuse + pad all Linear weights into one weight slab / one bias slab. Run ONCE."""
    blocks = params["blocks"]
    wb1 = block_diag(*[b[0] for b in blocks])          # (16, 16)
    bb1 = jnp.concatenate([b[1] for b in blocks])
    wb2 = block_diag(*[b[2] for b in blocks])          # (32, 16)
    bb2 = jnp.concatenate([b[3] for b in blocks])
    (wl1, bl1), (wl2, bl2), (wl3, bl3), (wl4, bl4) = params["local"]
    (wn1, bn1), (wn2, bn2) = params["main"]
    wih, whh, bih, bhh = params["lstm"]
    (wa1, ba1), (wa2, ba2) = params["actor"]
    (wci1, bci1), (wci2, bci2) = params["cint"]
    (wce1, bce1), (wce2, bce2) = params["cext"]

    # LSTM: one matmul on [x ; h], gate columns i,f,g,o. Pre-scale i/f/o by 0.5 so the
    # kernel can use sigmoid(x) = 0.5*(1 + tanh(x/2)) with a single tanh.
    w_lstm = jnp.concatenate([wih.T, whh.T], axis=0)   # (32, 64)
    b_lstm = bih + bhh
    gate_scale = jnp.concatenate(
        [jnp.full((HH,), 0.5), jnp.full((HH,), 0.5),
         jnp.ones((HH,)), jnp.full((HH,), 0.5)]).astype(jnp.float32)
    w_lstm = w_lstm * gate_scale[None, :]
    b_lstm = b_lstm * gate_scale

    w_h1 = jnp.concatenate([wa1.T, wci1.T, wce1.T], axis=1)   # (16, 24)
    b_h1 = jnp.concatenate([ba1, bci1, bce1])
    w_h2 = block_diag(wa2.T, wci2.T, wce2.T)                  # (24, 6)
    b_h2 = jnp.concatenate([ba2, bci2, bce2])

    w_slab = jnp.zeros((NW * WS, P), jnp.float32)
    b_slab = jnp.zeros((NB_ROWS, P), jnp.float32)

    def put_w(slab, slot, wt):
        wt = jnp.asarray(wt, jnp.float32)                 # transposed weight (in, out)
        return slab.at[slot * WS:slot * WS + wt.shape[0], :wt.shape[1]].set(wt)

    def fold_bias(slab, slot, bv, feed_one=False):
        # bias lives in weight sublane ONES_LANE; the activation carries 1.0 there.
        bv = jnp.asarray(bv, jnp.float32)
        slab = slab.at[slot * WS + ONES_LANE, :bv.shape[0]].set(bv)
        if feed_one:       # also emit 1.0 at output lane ONES_LANE for the next layer
            slab = slab.at[slot * WS + ONES_LANE, ONES_LANE].set(1.0)
        return slab

    def put_b(slab, row, bv, feed_one=False):
        bv = jnp.asarray(bv, jnp.float32)
        slab = slab.at[row, :bv.shape[0]].set(bv)
        if feed_one:
            slab = slab.at[row, ONES_LANE].set(1.0)
        return slab

    w_slab = put_w(w_slab, I_B1, wb1.T)
    w_slab = fold_bias(w_slab, I_B1, bb1, feed_one=True)
    w_slab = put_w(w_slab, I_B2, wb2.T)
    w_slab = fold_bias(w_slab, I_B2, bb2)
    w_slab = put_w(w_slab, I_L1, wl1.T)
    w_slab = put_w(w_slab, I_L2, wl2.T)
    w_slab = put_w(w_slab, I_L3, wl3.T)
    w_slab = fold_bias(w_slab, I_L3, bl3, feed_one=True)
    w_slab = put_w(w_slab, I_L4, wl4.T)
    w_slab = fold_bias(w_slab, I_L4, bl4, feed_one=True)
    w_slab = put_w(w_slab, I_N1, wn1.T)
    w_slab = fold_bias(w_slab, I_N1, bn1)
    w_slab = put_w(w_slab, I_N2, wn2.T)
    w_slab = put_w(w_slab, I_LSTM, w_lstm)
    w_slab = put_w(w_slab, I_H1, w_h1)
    w_slab = put_w(w_slab, I_H2, w_h2)
    w_slab = fold_bias(w_slab, I_H2, b_h2)

    b_slab = put_b(b_slab, B_L1, bl1)
    b_slab = put_b(b_slab, B_L2, bl2, feed_one=True)
    b_slab = put_b(b_slab, B_N2, bn2)
    b_slab = put_b(b_slab, B_LSTM, b_lstm)
    b_slab = put_b(b_slab, B_H1, b_h1, feed_one=True)
    return dict(w=w_slab, b=b_slab)


# ----------------------------- jitted per-step wrapper -----------------------------
def init_state_slab(hx, cx):
    """Build the initial (8,128) carried state slab from (hx, cx). Run once."""
    s = jnp.zeros((8, P), jnp.float32)
    s = s.at[2, :HH].set(jnp.asarray(hx, jnp.float32)[0])
    s = s.at[3, :HH].set(jnp.asarray(cx, jnp.float32)[0])
    return s


@jax.jit
def actor_critic_step(packed, slab, x):
    """One forward step. `slab` is either init_state_slab(...) or the previous step's
    output slab (rows 2/3 already hold h/c); only rows 0-1 get fresh observations."""
    x = jnp.asarray(x, jnp.float32)
    obs = jnp.zeros((2, P), jnp.float32)
    obs = obs.at[0, :STATE_DIM - 3].set(x[3:])                  # lidar -> lanes 0..15
    obs = obs.at[0, ONES_LANE].set(1.0)                         # bias-fold seed
    obs = obs.at[1, F4:F4 + 3].set(x[:3])                       # odom  -> lanes 16..18
    slab = jax.lax.dynamic_update_slice(slab, obs, (0, 0))

    vmem = pl.BlockSpec(memory_space=pltpu.MemorySpace.VMEM)
    out = pl.pallas_call(
        actor_critic_kernel,
        out_shape=jax.ShapeDtypeStruct((8, P), jnp.float32),
        in_specs=[vmem, vmem, vmem],
        out_specs=vmem,
        input_output_aliases={0: 0},          # output slab reuses the state-slab buffer
    )(slab, packed["w"], packed["b"])
    return out                                # raw slab; slice on the consumer side


def unpack_step(out):
    actor = out[0:1, :ACTION_DIM]
    cint = out[1:2, ACTION_DIM:ACTION_DIM + 1]
    cext = out[1:2, ACTION_DIM + 1:ACTION_DIM + 2]
    hx_new = out[2:3, :HH]
    cx_new = out[3:4, :HH]
    net_out = out[4, :G2]
    return actor, cint, cext, (hx_new, cx_new), net_out


# ----------------------------- parameter initialization -----------------------------
def linear_params(key, out_dim, in_dim):
    k1, k2 = jax.random.split(key)
    bound = 1.0 / math.sqrt(in_dim)
    w = jax.random.uniform(k1, (out_dim, in_dim), jnp.float32, -bound, bound)
    b = jax.random.uniform(k2, (out_dim,), jnp.float32, -bound, bound)
    return w, b


def init_params(key):
    nb = (STATE_DIM - 3) // 2
    keys = jax.random.split(key, 64)
    ki = iter(keys)

    blocks = []
    for _ in range(nb):
        w1, b1 = linear_params(next(ki), 2, 2)
        w2, b2 = linear_params(next(ki), 4, 2)
        blocks.append((w1, b1, w2, b2))

    wl1, bl1 = linear_params(next(ki), G1, 4 * nb)
    wl2, bl2 = linear_params(next(ki), 16, G1)
    wl3, bl3 = linear_params(next(ki), 16, 16)
    wl4, bl4 = linear_params(next(ki), F4, 16)

    wn1, bn1 = linear_params(next(ki), G1, F4 + 3)
    wn2, bn2 = linear_params(next(ki), G2, G1)

    bound = 1.0 / math.sqrt(HH)
    k1, k2, k3, k4 = jax.random.split(next(ki), 4)
    wih = jax.random.uniform(k1, (4 * HH, G2), jnp.float32, -bound, bound)
    whh = jax.random.uniform(k2, (4 * HH, HH), jnp.float32, -bound, bound)
    bih = jax.random.uniform(k3, (4 * HH,), jnp.float32, -bound, bound)
    bhh = jax.random.uniform(k4, (4 * HH,), jnp.float32, -bound, bound)

    wa1, ba1 = linear_params(next(ki), G3, HH)
    wa2, ba2 = linear_params(next(ki), ACTION_DIM, G3)
    wci1, bci1 = linear_params(next(ki), G3, HH)
    wci2, bci2 = linear_params(next(ki), 1, G3)
    wce1, bce1 = linear_params(next(ki), G3, HH)
    wce2, bce2 = linear_params(next(ki), 1, G3)

    return dict(blocks=blocks,
                local=[(wl1, bl1), (wl2, bl2), (wl3, bl3), (wl4, bl4)],
                main=[(wn1, bn1), (wn2, bn2)],
                lstm=(wih, whh, bih, bhh),
                actor=[(wa1, ba1), (wa2, ba2)],
                cint=[(wci1, bci1), (wci2, bci2)],
                cext=[(wce1, bce1), (wce2, bce2)])


# ----------------------------- pure-JAX reference -----------------------------
def reference_forward(params, x, hx, cx):
    relu = jax.nn.relu
    o_odom, o_lidar = x[:3], x[3:]
    nb = (STATE_DIM - 3) // 2
    outs = []
    for b in range(nb):
        xb = o_lidar[2 * b:2 * b + 2]
        w1, b1, w2, b2 = params["blocks"][b]
        outs.append(relu(w2 @ relu(w1 @ xb + b1) + b2))
    z = jnp.concatenate(outs)
    for w, bv in params["local"]:
        z = relu(w @ z + bv)
    h = z
    n = jnp.concatenate([h, o_odom])
    for w, bv in params["main"]:
        n = relu(w @ n + bv)
    net_out = n
    wih, whh, bih, bhh = params["lstm"]
    gates = net_out[None, :] @ wih.T + bih + hx @ whh.T + bhh
    i_g = jax.nn.sigmoid(gates[:, 0:HH])
    f_g = jax.nn.sigmoid(gates[:, HH:2 * HH])
    g_g = jnp.tanh(gates[:, 2 * HH:3 * HH])
    o_g = jax.nn.sigmoid(gates[:, 3 * HH:4 * HH])
    c_new = f_g * cx + i_g * g_g
    h_new = o_g * jnp.tanh(c_new)
    (wa1, ba1), (wa2, ba2) = params["actor"]
    probs = jax.nn.softmax(relu(h_new @ wa1.T + ba1) @ wa2.T + ba2, axis=0)
    (wci1, bci1), (wci2, bci2) = params["cint"]
    ci = relu(h_new @ wci1.T + bci1) @ wci2.T + bci2
    (wce1, bce1), (wce2, bce2) = params["cext"]
    ce = relu(h_new @ wce1.T + bce1) @ wce2.T + bce2
    return probs, ci, ce, (h_new, c_new), net_out


if __name__ == "__main__":
    key = jax.random.PRNGKey(0)
    kp, kx, kh, kc = jax.random.split(key, 4)
    params = init_params(kp)
    x = jax.random.normal(kx, (STATE_DIM,), jnp.float32)
    hx = 0.1 * jax.random.normal(kh, (1, HH), jnp.float32)
    cx = 0.1 * jax.random.normal(kc, (1, HH), jnp.float32)

    packed = pack_params(params)          # hoisted out of the per-step path (run once)
    slab0 = init_state_slab(hx, cx)

    # ----- step 1 -----
    out_slab = jax.block_until_ready(actor_critic_step(packed, slab0, x))
    out1 = unpack_step(out_slab)
    ref1 = reference_forward(params, x, hx, cx)

    def check(kern, ref):
        actor_k, ci_k, ce_k, (hx_k, cx_k), no_k = kern
        actor_r, ci_r, ce_r, (hx_r, cx_r), no_r = ref
        for a, b in [(actor_k, actor_r), (ci_k, ci_r), (ce_k, ce_r),
                     (hx_k, hx_r), (cx_k, cx_r), (no_k, no_r)]:
            assert a.shape == b.shape, (a.shape, b.shape)
            assert jnp.allclose(a, b, atol=1e-4, rtol=1e-4)

    check(out1, ref1)

    # ----- step 2: feed the output slab straight back as the next state slab -----
    x2 = jax.random.normal(jax.random.PRNGKey(1), (STATE_DIM,), jnp.float32)
    out_slab2 = jax.block_until_ready(actor_critic_step(packed, out_slab, x2))
    out2 = unpack_step(out_slab2)
    ref2 = reference_forward(params, x2, ref1[3][0], ref1[3][1])
    check(out2, ref2)

    print("KERNEL_OK")
</pallas_src>

<mosaic_0001>
module attributes {stable_mosaic.version = 11 : i64} {
  func.func @actor_critic_kernel(%arg0: memref<8x128xf32, #tpu.memory_space<vmem>>, %arg1: memref<352x128xf32, #tpu.memory_space<vmem>>, %arg2: memref<8x128xf32, #tpu.memory_space<vmem>>, %arg3: memref<8x128xf32, #tpu.memory_space<vmem>>) attributes {dimension_semantics = [], scalar_prefetch = 0 : i64, scratch_operands = 0 : i64, tpu.core_type = #tpu.core_type<tc>} {
    %c0 = arith.constant 0 : index
    %c0_0 = arith.constant 0 : index
    %0 = vector.load %arg0[%c0, %c0_0] : memref<8x128xf32, #tpu.memory_space<vmem>>, vector<1x128xf32>
    %c1 = arith.constant 1 : index
    %c0_1 = arith.constant 0 : index
    %1 = vector.load %arg0[%c1, %c0_1] : memref<8x128xf32, #tpu.memory_space<vmem>>, vector<1x128xf32>
    %c2 = arith.constant 2 : index
    %c0_2 = arith.constant 0 : index
    %2 = vector.load %arg0[%c2, %c0_2] : memref<8x128xf32, #tpu.memory_space<vmem>>, vector<1x128xf32>
    %c3 = arith.constant 3 : index
    %c0_3 = arith.constant 0 : index
    %3 = vector.load %arg0[%c3, %c0_3] : memref<8x128xf32, #tpu.memory_space<vmem>>, vector<1x128xf32>
    %c0_4 = arith.constant 0 : index
    %c0_5 = arith.constant 0 : index
    %4 = vector.load %arg1[%c0_4, %c0_5] : memref<352x128xf32, #tpu.memory_space<vmem>>, vector<32x128xf32>
    %5 = vector.extract_strided_slice %0 {offsets = [0, 0], sizes = [1, 32], strides = [1, 1]} : vector<1x128xf32> to vector<1x32xf32>
    %cst = arith.constant dense<0.000000e+00> : vector<1x128xf32>
    %6 = tpu.matmul %5, %4, %cst {dimension_numbers = #tpu.dot_dimension_numbers<[1], [0], [0], [1], [0, 0, 1, 1], [], []>} : vector<1x32xf32>, vector<32x128xf32>, vector<1x128xf32> -> vector<1x128xf32>
    %cst_6 = arith.constant 0.000000e+00 : f32
    %7 = vector.broadcast %cst_6 : f32 to vector<1x128xf32>
    %8 = arith.maximumf %6, %7 : vector<1x128xf32>
    %c32 = arith.constant 32 : index
    %c0_7 = arith.constant 0 : index
    %9 = vector.load %arg1[%c32, %c0_7] : memref<352x128xf32, #tpu.memory_space<vmem>>, vector<32x128xf32>
    %10 = vector.extract_strided_slice %8 {offsets = [0, 0], sizes = [1, 32], strides = [1, 1]} : vector<1x128xf32> to vector<1x32xf32>
    %cst_8 = arith.constant dense<0.000000e+00> : vector<1x128xf32>
    %11 = tpu.matmul %10, %9, %cst_8 {dimension_numbers = #tpu.dot_dimension_numbers<[1], [0], [0], [1], [0, 0, 1, 1], [], []>} : vector<1x32xf32>, vector<32x128xf32>, vector<1x128xf32> -> vector<1x128xf32>
    %cst_9 = arith.constant 0.000000e+00 : f32
    %12 = vector.broadcast %cst_9 : f32 to vector<1x128xf32>
    %13 = arith.maximumf %11, %12 : vector<1x128xf32>
    %c64 = arith.constant 64 : index
    %c0_10 = arith.constant 0 : index
    %14 = vector.load %arg1[%c64, %c0_10] : memref<352x128xf32, #tpu.memory_space<vmem>>, vector<32x128xf32>
    %15 = vector.extract_strided_slice %13 {offsets = [0, 0], sizes = [1, 32], strides = [1, 1]} : vector<1x128xf32> to vector<1x32xf32>
    %cst_11 = arith.constant dense<0.000000e+00> : vector<1x128xf32>
    %16 = tpu.matmul %15, %14, %cst_11 {dimension_numbers = #tpu.dot_dimension_numbers<[1], [0], [0], [1], [0, 0, 1, 1], [], []>} : vector<1x32xf32>, vector<32x128xf32>, vector<1x128xf32> -> vector<1x128xf32>
    %c0_12 = arith.constant 0 : index
    %c0_13 = arith.constant 0 : index
    %17 = vector.load %arg2[%c0_12, %c0_13] : memref<8x128xf32, #tpu.memory_space<vmem>>, vector<1x128xf32>
    %18 = arith.addf %16, %17 : vector<1x128xf32>
    %cst_14 = arith.constant 0.000000e+00 : f32
    %19 = vector.broadcast %cst_14 : f32 to vector<1x128xf32>
    %20 = arith.maximumf %18, %19 : vector<1x128xf32>
    %c96 = arith.constant 96 : index
    %c0_15 = arith.constant 0 : index
    %21 = vector.load %arg1[%c96, %c0_15] : memref<352x128xf32, #tpu.memory_space<vmem>>, vector<32x128xf32>
    %22 = vector.extract_strided_slice %20 {offsets = [0, 0], sizes = [1, 32], strides = [1, 1]} : vector<1x128xf32> to vector<1x32xf32>
    %cst_16 = arith.constant dense<0.000000e+00> : vector<1x128xf32>
    %23 = tpu.matmul %22, %21, %cst_16 {dimension_numbers = #tpu.dot_dimension_numbers<[1], [0], [0], [1], [0, 0, 1, 1], [], []>} : vector<1x32xf32>, vector<32x128xf32>, vector<1x128xf32> -> vector<1x128xf32>
    %c1_17 = arith.constant 1 : index
    %c0_18 = arith.constant 0 : index
    %24 = vector.load %arg2[%c1_17, %c0_18] : memref<8x128xf32, #tpu.memory_space<vmem>>, vector<1x128xf32>
    %25 = arith.addf %23, %24 : vector<1x128xf32>
    %cst_19 = arith.constant 0.000000e+00 : f32
    %26 = vector.broadcast %cst_19 : f32 to vector<1x128xf32>
    %27 = arith.maximumf %25, %26 : vector<1x128xf32>
    %c128 = arith.constant 128 : index
    %c0_20 = arith.constant 0 : index
    %28 = vector.load %arg1[%c128, %c0_20] : memref<352x128xf32, #tpu.memory_space<vmem>>, vector<32x128xf32>
    %29 = vector.extract_strided_slice %27 {offsets = [0, 0], sizes = [1, 32], strides = [1, 1]} : vector<1x128xf32> to vector<1x32xf32>
    %cst_21 = arith.constant dense<0.000000e+00> : vector<1x128xf32>
    %30 = tpu.matmul %29, %28, %cst_21 {dimension_numbers = #tpu.dot_dimension_numbers<[1], [0], [0], [1], [0, 0, 1, 1], [], []>} : vector<1x32xf32>, vector<32x128xf32>, vector<1x128xf32> -> vector<1x128xf32>
    %cst_22 = arith.constant 0.000000e+00 : f32
    %31 = vector.broadcast %cst_22 : f32 to vector<1x128xf32>
    %32 = arith.maximumf %30, %31 : vector<1x128xf32>
    %c160 = arith.constant 160 : index
    %c0_23 = arith.constant 0 : index
    %33 = vector.load %arg1[%c160, %c0_23] : memref<352x128xf32, #tpu.memory_space<vmem>>, vector<32x128xf32>
    %34 = vector.extract_strided_slice %32 {offsets = [0, 0], sizes = [1, 32], strides = [1, 1]} : vector<1x128xf32> to vector<1x32xf32>
    %cst_24 = arith.constant dense<0.000000e+00> : vector<1x128xf32>
    %35 = tpu.matmul %34, %33, %cst_24 {dimension_numbers = #tpu.dot_dimension_numbers<[1], [0], [0], [1], [0, 0, 1, 1], [], []>} : vector<1x32xf32>, vector<32x128xf32>, vector<1x128xf32> -> vector<1x128xf32>
    %cst_25 = arith.constant 0.000000e+00 : f32
    %36 = vector.broadcast %cst_25 : f32 to vector<1x128xf32>
    %37 = arith.maximumf %35, %36 : vector<1x128xf32>
    %38 = arith.addf %37, %1 : vector<1x128xf32>
    %c192 = arith.constant 192 : index
    %c0_26 = arith.constant 0 : index
    %39 = vector.load %arg1[%c192, %c0_26] : memref<352x128xf32, #tpu.memory_space<vmem>>, vector<32x128xf32>
    %40 = vector.extract_strided_slice %38 {offsets = [0, 0], sizes = [1, 32], strides = [1, 1]} : vector<1x128xf32> to vector<1x32xf32>
    %cst_27 = arith.constant dense<0.000000e+00> : vector<1x128xf32>
    %41 = tpu.matmul %40, %39, %cst_27 {dimension_numbers = #tpu.dot_dimension_numbers<[1], [0], [0], [1], [0, 0, 1, 1], [], []>} : vector<1x32xf32>, vector<32x128xf32>, vector<1x128xf32> -> vector<1x128xf32>
    %cst_28 = arith.constant 0.000000e+00 : f32
    %42 = vector.broadcast %cst_28 : f32 to vector<1x128xf32>
    %43 = arith.maximumf %41, %42 : vector<1x128xf32>
    %c224 = arith.constant 224 : index
    %c0_29 = arith.constant 0 : index
    %44 = vector.load %arg1[%c224, %c0_29] : memref<352x128xf32, #tpu.memory_space<vmem>>, vector<32x128xf32>
    %45 = vector.extract_strided_slice %43 {offsets = [0, 0], sizes = [1, 32], strides = [1, 1]} : vector<1x128xf32> to vector<1x32xf32>
    %cst_30 = arith.constant dense<0.000000e+00> : vector<1x128xf32>
    %46 = tpu.matmul %45, %44, %cst_30 {dimension_numbers = #tpu.dot_dimension_numbers<[1], [0], [0], [1], [0, 0, 1, 1], [], []>} : vector<1x32xf32>, vector<32x128xf32>, vector<1x128xf32> -> vector<1x128xf32>
    %c2_31 = arith.constant 2 : index
    %c0_32 = arith.constant 0 : index
    %47 = vector.load %arg2[%c2_31, %c0_32] : memref<8x128xf32, #tpu.memory_space<vmem>>, vector<1x128xf32>
    %48 = arith.addf %46, %47 : vector<1x128xf32>
    %cst_33 = arith.constant 0.000000e+00 : f32
    %49 = vector.broadcast %cst_33 : f32 to vector<1x128xf32>
    %50 = arith.maximumf %48, %49 : vector<1x128xf32>
    %c16_i32 = arith.constant 16 : i32
    %51 = tpu.dynamic_rotate %2 by %c16_i32 dim 1 : vector<1x128xf32>, i32 -> vector<1x128xf32>
    %52 = arith.addf %50, %51 : vector<1x128xf32>
    %c256 = arith.constant 256 : index
    %c0_34 = arith.constant 0 : index
    %53 = vector.load %arg1[%c256, %c0_34] : memref<352x128xf32, #tpu.memory_space<vmem>>, vector<32x128xf32>
    %54 = vector.extract_strided_slice %52 {offsets = [0, 0], sizes = [1, 32], strides = [1, 1]} : vector<1x128xf32> to vector<1x32xf32>
    %cst_35 = arith.constant dense<0.000000e+00> : vector<1x128xf32>
    %55 = tpu.matmul %54, %53, %cst_35 {dimension_numbers = #tpu.dot_dimension_numbers<[1], [0], [0], [1], [0, 0, 1, 1], [], []>} : vector<1x32xf32>, vector<32x128xf32>, vector<1x128xf32> -> vector<1x128xf32>
    %c3_36 = arith.constant 3 : index
    %c0_37 = arith.constant 0 : index
    %56 = vector.load %arg2[%c3_36, %c0_37] : memref<8x128xf32, #tpu.memory_space<vmem>>, vector<1x128xf32>
    %57 = arith.addf %55, %56 : vector<1x128xf32>
    %58 = tpu.iota {dimensions = array<i32: 1>} : vector<1x128xi32>
    %c32_i32 = arith.constant 32 : i32
    %59 = vector.broadcast %c32_i32 : i32 to vector<1x128xi32>
    %60 = arith.cmpi sge, %58, %59 : vector<1x128xi32>
    %c48_i32 = arith.constant 48 : i32
    %61 = vector.broadcast %c48_i32 : i32 to vector<1x128xi32>
    %62 = arith.cmpi slt, %58, %61 : vector<1x128xi32>
    %63 = arith.andi %60, %62 : vector<1x128xi1>
    %64 = math.tanh %57 : vector<1x128xf32>
    %cst_38 = arith.constant 5.000000e-01 : f32
    %65 = vector.broadcast %cst_38 : f32 to vector<1x128xf32>
    %66 = arith.mulf %65, %64 : vector<1x128xf32>
    %cst_39 = arith.constant 5.000000e-01 : f32
    %67 = vector.broadcast %cst_39 : f32 to vector<1x128xf32>
    %68 = arith.addf %66, %67 : vector<1x128xf32>
    %69 = arith.select %63, %64, %68 : vector<1x128xi1>, vector<1x128xf32>
    %c112_i32 = arith.constant 112 : i32
    %70 = tpu.dynamic_rotate %69 by %c112_i32 dim 1 : vector<1x128xf32>, i32 -> vector<1x128xf32>
    %c96_i32 = arith.constant 96 : i32
    %71 = tpu.dynamic_rotate %69 by %c96_i32 dim 1 : vector<1x128xf32>, i32 -> vector<1x128xf32>
    %c80_i32 = arith.constant 80 : i32
    %72 = tpu.dynamic_rotate %69 by %c80_i32 dim 1 : vector<1x128xf32>, i32 -> vector<1x128xf32>
    %c16_i32_40 = arith.constant 16 : i32
    %73 = vector.broadcast %c16_i32_40 : i32 to vector<1x128xi32>
    %74 = arith.cmpi slt, %58, %73 : vector<1x128xi32>
    %75 = arith.mulf %70, %3 : vector<1x128xf32>
    %76 = arith.mulf %69, %71 : vector<1x128xf32>
    %77 = arith.addf %75, %76 : vector<1x128xf32>
    %cst_41 = arith.constant 0.000000e+00 : f32
    %78 = vector.broadcast %cst_41 : f32 to vector<1x128xf32>
    %79 = arith.select %74, %77, %78 : vector<1x128xi1>, vector<1x128xf32>
    %80 = math.tanh %79 : vector<1x128xf32>
    %81 = arith.mulf %72, %80 : vector<1x128xf32>
    %cst_42 = arith.constant 0.000000e+00 : f32
    %82 = vector.broadcast %cst_42 : f32 to vector<1x128xf32>
    %83 = arith.select %74, %81, %82 : vector<1x128xi1>, vector<1x128xf32>
    %c288 = arith.constant 288 : index
    %c0_43 = arith.constant 0 : index
    %84 = vector.load %arg1[%c288, %c0_43] : memref<352x128xf32, #tpu.memory_space<vmem>>, vector<32x128xf32>
    %85 = vector.extract_strided_slice %83 {offsets = [0, 0], sizes = [1, 32], strides = [1, 1]} : vector<1x128xf32> to vector<1x32xf32>
    %cst_44 = arith.constant dense<0.000000e+00> : vector<1x128xf32>
    %86 = tpu.matmul %85, %84, %cst_44 {dimension_numbers = #tpu.dot_dimension_numbers<[1], [0], [0], [1], [0, 0, 1, 1], [], []>} : vector<1x32xf32>, vector<32x128xf32>, vector<1x128xf32> -> vector<1x128xf32>
    %c4 = arith.constant 4 : index
    %c0_45 = arith.constant 0 : index
    %87 = vector.load %arg2[%c4, %c0_45] : memref<8x128xf32, #tpu.memory_space<vmem>>, vector<1x128xf32>
    %88 = arith.addf %86, %87 : vector<1x128xf32>
    %cst_46 = arith.constant 0.000000e+00 : f32
    %89 = vector.broadcast %cst_46 : f32 to vector<1x128xf32>
    %90 = arith.maximumf %88, %89 : vector<1x128xf32>
    %c320 = arith.constant 320 : index
    %c0_47 = arith.constant 0 : index
    %91 = vector.load %arg1[%c320, %c0_47] : memref<352x128xf32, #tpu.memory_space<vmem>>, vector<32x128xf32>
    %92 = vector.extract_strided_slice %90 {offsets = [0, 0], sizes = [1, 32], strides = [1, 1]} : vector<1x128xf32> to vector<1x32xf32>
    %cst_48 = arith.constant dense<0.000000e+00> : vector<1x128xf32>
    %93 = tpu.matmul %92, %91, %cst_48 {dimension_numbers = #tpu.dot_dimension_numbers<[1], [0], [0], [1], [0, 0, 1, 1], [], []>} : vector<1x32xf32>, vector<32x128xf32>, vector<1x128xf32> -> vector<1x128xf32>
    %cst_49 = arith.constant 1.000000e+00 : f32
    %94 = vector.broadcast %cst_49 : f32 to vector<1x128xf32>
    %cst_50 = arith.constant 0.000000e+00 : f32
    %95 = vector.broadcast %cst_50 : f32 to vector<3x128xf32>
    %96 = tpu.concatenate %94, %93, %83, %79, %50, %95 in 0 : vector<1x128xf32>, vector<1x128xf32>, vector<1x128xf32>, vector<1x128xf32>, vector<1x128xf32>, vector<3x128xf32> -> vector<8x128xf32>
    %c0_51 = arith.constant 0 : index
    %c0_52 = arith.constant 0 : index
    %97 = vector.load %arg3[%c0_51, %c0_52] : memref<8x128xf32, #tpu.memory_space<vmem>>, vector<8x128xf32>
    tpu.vector_store %arg3[%c0_51, %c0_52], %96 {strides = array<i32>} : memref<8x128xf32, #tpu.memory_space<vmem>>, vector<8x128xf32>,
    return
  }
}

</mosaic_0001>

<llo_original>
// kernel: actor_critic_step.1
$region0: #{actor_critic_step.1}
  #allocation0 [shape = 'u32[]', space=smem, size = 0x4, offset = 0x4, fixed_abs, tag = 'smem constant byte address 0x4 - core index']
  #allocation1 [shape = 'u32[144,128]{1,0:T(1,128)}', space=vmem, size = 0x12000, scoped, tag = 'internal scratch']
  %s0 = inlined_call_operand.hbm [shape: f32[8,128], index: 0, kind: input, shape index: {}, may-alias: {0,3}]
  %s1 = inlined_call_operand.hbm [shape: f32[352,128], index: 1, kind: input, shape index: {}]
  %s2 = inlined_call_operand.vmem [shape: f32[8,128], index: 2, kind: input, shape index: {}]
  %s3 = inlined_call_operand.hbm [shape: f32[8,128], index: 3, kind: output, shape index: {}, may-alias: {0,3}]
  %s4 = sld [smem:[#allocation0]]
  $region30: #{actor_critic_step.1} parent=0
    _
  %s6 = ssub.s32 1, %s4
  %s7 = scalar_select 0, %s6, %s4
  $region1: #{actor_critic_step.1} parent=0
    #allocation2 [shape = 'u8[4096]{0}', space=vmem, size = 0x1000, scoped, tag = 'input window, operand 0, single buffered']
    #allocation3 [shape = 's32[1]{0}', space=sflag, size = 0x4, scoped, tag = 'scoped memory for actor_critic_step.1']
    #allocation4 [shape = 's32[1]{0}', space=sflag, size = 0x4, scoped, tag = 'scoped memory for actor_critic_step.1']
    #allocation5 [shape = 'u8[180224]{0}', space=vmem, size = 0x2c000, scoped, tag = 'input window, operand 1, single buffered']
    #allocation6 [shape = 's32[1]{0}', space=sflag, size = 0x4, scoped, tag = 'scoped memory for actor_critic_step.1']
    #allocation7 [shape = 'u8[4096]{0}', space=vmem, size = 0x1000, scoped, tag = 'output window, operand 0, single buffered']
    %8 = vsyncpa [#allocation3], 0
    %9 = vsyncpa [#allocation6], 0
    %10 = vsyncpa [#allocation4], 0
    // Predicated region
    $region2: #{actor_critic_step.1} parent=1 // pred_check
      _
    $region3: #{actor_critic_step.1} parent=1 // pred_check_branch
      %12 = sbr.rel (0) target = $region5
    $region4: #{actor_critic_step.1} parent=1 // pred_region
      %s14 = ssub.s32 128, 128
      %15 = vsyncadd [#allocation3], %s14
      %s17 = sshll.u32 [#allocation2], 4
      %s18 = int_to_ptr.vmem [resolvable:$true] %s17
      %20 = dma.hbm_to_vmem [thread:$0]  %s0, 128, %s18, [#allocation3]
    $region5: #{actor_critic_step.1} parent=1 // pred_fallthru
      _
    // Predicated region
    $region6: #{actor_critic_step.1} parent=1 // pred_check
      _
    $region7: #{actor_critic_step.1} parent=1 // pred_check_branch
      %22 = sbr.rel (0) target = $region9
    $region8: #{actor_critic_step.1} parent=1 // pred_region
      %s24 = ssub.s32 5632, 5632
      %25 = vsyncadd [#allocation6], %s24
      %s26 = sshll.u32 [#allocation5], 4
      %s27 = int_to_ptr.vmem [resolvable:$true] %s26
      %32 = dma.hbm_to_vmem [thread:$0]  %s1, 5632, %s27, [#allocation6], 128, 128, 8
    $region9: #{actor_critic_step.1} parent=1 // pred_fallthru
      _
    // Predicated region
    $region10: #{actor_critic_step.1} parent=1 // pred_check
      _
    $region11: #{actor_critic_step.1} parent=1 // pred_check_branch
      %34 = sbr.rel (0) target = $region13
    $region12: #{actor_critic_step.1} parent=1 // pred_region
      _
    $region13: #{actor_critic_step.1} parent=1 // pred_fallthru
      _
    // Predicated region
    $region14: #{actor_critic_step.1} parent=1 // pred_check
      _
    $region15: #{actor_critic_step.1} parent=1 // pred_check_branch
      %36 = sbr.rel (0) target = $region17
    $region16: #{actor_critic_step.1} parent=1 // pred_region
      %37 = dma.done [#allocation3], 128
    $region17: #{actor_critic_step.1} parent=1 // pred_fallthru
      _
    // Predicated region
    $region18: #{actor_critic_step.1} parent=1 // pred_check
      _
    $region19: #{actor_critic_step.1} parent=1 // pred_check_branch
      %39 = sbr.rel (0) target = $region21
    $region20: #{actor_critic_step.1} parent=1 // pred_region
      %40 = dma.done [#allocation6], 5632
    $region21: #{actor_critic_step.1} parent=1 // pred_fallthru
      _
    %v41 = vld [vmem:[#allocation2] sm:$0x1]
    %v42 = vld [vmem:[#allocation2 + $0x1] sm:$0x1]
    %v43 = vld [vmem:[#allocation2 + $0x2] sm:$0x1]
    %v44 = vld [vmem:[#allocation2 + $0x3] sm:$0x1]
    %v45 = vld [vmem:[#allocation5] sm:$0xff]
    %v46 = vld [vmem:[#allocation5 + $0x8] sm:$0xff]
    %v47 = vld [vmem:[#allocation5 + $0x10] sm:$0xff]
    %v48 = vld [vmem:[#allocation5 + $0x18] sm:$0xff]
    %vm49 = vcmask 261120
    %v51 = vsel %vm49, %v41, 0
    %53 = vmatprep.subr.mxu0 0.0
    %54 = vmatpush1.msra.mxu0 %v45
    %55 = vmatprep.subr.mxu0 0.0
    %56 = vmatpush1.msra.mxu0 %v46
    %57 = vmatprep.subr.mxu0 0.0
    %58 = vmatpush1.msra.mxu0 %v47
    %59 = vmatprep.subr.mxu0 0.0
    %60 = vmatpush1.msra.mxu0 %v48
    %61 = vmatprep.subr.mxu0 0.0
    %62 = vmatpush1.msra.mxu0 0.0
    %63 = vmatprep.subr.mxu0 0.0
    %64 = vmatpush1.msra.mxu0 0.0
    %65 = vmatprep.subr.mxu0 0.0
    %66 = vmatpush1.msra.mxu0 0.0
    %67 = vmatprep.subr.mxu0 0.0
    %68 = vmatpush1.msra.mxu0 0.0
    %69 = vmatprep.subr.mxu0 0.0
    %70 = vmatpush1.msra.mxu0 0.0
    %71 = vmatprep.subr.mxu0 0.0
    %72 = vmatpush1.msra.mxu0 0.0
    %73 = vmatprep.subr.mxu0 0.0
    %74 = vmatpush1.msra.mxu0 0.0
    %75 = vmatprep.subr.mxu0 0.0
    %76 = vmatpush1.msra.mxu0 0.0
    %77 = vmatprep.subr.mxu0 0.0
    %78 = vmatpush1.msra.mxu0 0.0
    %79 = vmatprep.subr.mxu0 0.0
    %80 = vmatpush1.msra.mxu0 0.0
    %81 = vmatprep.subr.mxu0 0.0
    %82 = vmatpush1.msra.mxu0 0.0
    %83 = vmatprep.subr.mxu0 0.0
    %84 = vmatpush1.msra.mxu0 0.0
    %85 = vmatprep.subr.mxu0 0.0
    %86 = vmatpush1.msra.mxu0 0.0
    %87 = vmatprep.subr.mxu0 0.0
    %88 = vmatpush1.msra.mxu0 0.0
    %89 = vmatprep.subr.mxu0 0.0
    %90 = vmatpush1.msra.mxu0 0.0
    %91 = vmatprep.subr.mxu0 0.0
    %92 = vmatpush1.msra.mxu0 0.0
    %93 = vmatprep.subr.mxu0 0.0
    %94 = vmatpush1.msra.mxu0 0.0
    %95 = vmatprep.subr.mxu0 0.0
    %96 = vmatpush1.msra.mxu0 0.0
    %97 = vmatprep.subr.mxu0 0.0
    %98 = vmatpush1.msra.mxu0 0.0
    %99 = vmatprep.subr.mxu0 0.0
    %100 = vmatpush1.msra.mxu0 0.0
    %101 = vmatprep.subr.mxu0 0.0
    %102 = vmatpush1.msra.mxu0 0.0
    %103 = vmatprep.subr.mxu0 0.0
    %104 = vmatpush1.msra.mxu0 0.0
    %105 = vmatprep.subr.mxu0 0.0
    %106 = vmatpush1.msra.mxu0 0.0
    %107 = vmatprep.subr.mxu0 0.0
    %108 = vmatpush1.msra.mxu0 0.0
    %109 = vmatprep.subr.mxu0 0.0
    %110 = vmatpush1.msra.mxu0 0.0
    %111 = vmatprep.subr.mxu0 0.0
    %112 = vmatpush1.msra.mxu0 0.0
    %113 = vmatprep.subr.mxu0 0.0
    %114 = vmatpush1.msra.mxu0 0.0
    %115 = vmatprep.subr.mxu0 0.0
    %116 = vmatpush1.msra.mxu0 0.0
    %117 = vmatprep.mubr.f32.mxu0 0.0
    %118 = vmatmul.mubr.f32.gmra.mrb[0].mxu0 %v51
    %v119 = vpop.f32.mrb[0].mxu0
    %v120 = vadd.f32 0.0, %v119
    %v121 = vpop.f32.mrb[0].mxu0
    %122 = vdwg.mxu0
    %v123 = vmax.f32 %v120, 0.0
    %v124 = vld [vmem:[#allocation5 + $0x20] sm:$0xff]
    %v125 = vld [vmem:[#allocation5 + $0x28] sm:$0xff]
    %v126 = vld [vmem:[#allocation5 + $0x30] sm:$0xff]
    %v127 = vld [vmem:[#allocation5 + $0x38] sm:$0xff]
    %v129 = vsel %vm49, %v123, 0
    %131 = vmatprep.subr.mxu0 0.0
    %132 = vmatpush1.msra.mxu0 %v124
    %133 = vmatprep.subr.mxu0 0.0
    %134 = vmatpush1.msra.mxu0 %v125
    %135 = vmatprep.subr.mxu0 0.0
    %136 = vmatpush1.msra.mxu0 %v126
    %137 = vmatprep.subr.mxu0 0.0
    %138 = vmatpush1.msra.mxu0 %v127
    %139 = vmatprep.subr.mxu0 0.0
    %140 = vmatpush1.msra.mxu0 0.0
    %141 = vmatprep.subr.mxu0 0.0
    %142 = vmatpush1.msra.mxu0 0.0
    %143 = vmatprep.subr.mxu0 0.0
    %144 = vmatpush1.msra.mxu0 0.0
    %145 = vmatprep.subr.mxu0 0.0
    %146 = vmatpush1.msra.mxu0 0.0
    %147 = vmatprep.subr.mxu0 0.0
    %148 = vmatpush1.msra.mxu0 0.0
    %149 = vmatprep.subr.mxu0 0.0
    %150 = vmatpush1.msra.mxu0 0.0
    %151 = vmatprep.subr.mxu0 0.0
    %152 = vmatpush1.msra.mxu0 0.0
    %153 = vmatprep.subr.mxu0 0.0
    %154 = vmatpush1.msra.mxu0 0.0
    %155 = vmatprep.subr.mxu0 0.0
    %156 = vmatpush1.msra.mxu0 0.0
    %157 = vmatprep.subr.mxu0 0.0
    %158 = vmatpush1.msra.mxu0 0.0
    %159 = vmatprep.subr.mxu0 0.0
    %160 = vmatpush1.msra.mxu0 0.0
    %161 = vmatprep.subr.mxu0 0.0
    %162 = vmatpush1.msra.mxu0 0.0
    %163 = vmatprep.subr.mxu0 0.0
    %164 = vmatpush1.msra.mxu0 0.0
    %165 = vmatprep.subr.mxu0 0.0
    %166 = vmatpush1.msra.mxu0 0.0
    %167 = vmatprep.subr.mxu0 0.0
    %168 = vmatpush1.msra.mxu0 0.0
    %169 = vmatprep.subr.mxu0 0.0
    %170 = vmatpush1.msra.mxu0 0.0
    %171 = vmatprep.subr.mxu0 0.0
    %172 = vmatpush1.msra.mxu0 0.0
    %173 = vmatprep.subr.mxu0 0.0
    %174 = vmatpush1.msra.mxu0 0.0
    %175 = vmatprep.subr.mxu0 0.0
    %176 = vmatpush1.msra.mxu0 0.0
    %177 = vmatprep.subr.mxu0 0.0
    %178 = vmatpush1.msra.mxu0 0.0
    %179 = vmatprep.subr.mxu0 0.0
    %180 = vmatpush1.msra.mxu0 0.0
    %181 = vmatprep.subr.mxu0 0.0
    %182 = vmatpush1.msra.mxu0 0.0
    %183 = vmatprep.subr.mxu0 0.0
    %184 = vmatpush1.msra.mxu0 0.0
    %185 = vmatprep.subr.mxu0 0.0
    %186 = vmatpush1.msra.mxu0 0.0
    %187 = vmatprep.subr.mxu0 0.0
    %188 = vmatpush1.msra.mxu0 0.0
    %189 = vmatprep.subr.mxu0 0.0
    %190 = vmatpush1.msra.mxu0 0.0
    %191 = vmatprep.subr.mxu0 0.0
    %192 = vmatpush1.msra.mxu0 0.0
    %193 = vmatprep.subr.mxu0 0.0
    %194 = vmatpush1.msra.mxu0 0.0
    %195 = vmatprep.mubr.f32.mxu0 0.0
    %196 = vmatmul.mubr.f32.gmra.mrb[0].mxu0 %v129
    %v197 = vpop.f32.mrb[0].mxu0
    %v198 = vadd.f32 0.0, %v197
    %v199 = vpop.f32.mrb[0].mxu0
    %200 = vdwg.mxu0
    %v201 = vmax.f32 %v198, 0.0
    %v202 = vld [vmem:[#allocation5 + $0x40] sm:$0xff]
    %v203 = vld [vmem:[#allocation5 + $0x48] sm:$0xff]
    %v204 = vld [vmem:[#allocation5 + $0x50] sm:$0xff]
    %v205 = vld [vmem:[#allocation5 + $0x58] sm:$0xff]
    %v206 = vld [vmem:[%s2] sm:$0x1]
    %v208 = vsel %vm49, %v201, 0
    %210 = vmatprep.subr.mxu0 0.0
    %211 = vmatpush1.msra.mxu0 %v202
    %212 = vmatprep.subr.mxu0 0.0
    %213 = vmatpush1.msra.mxu0 %v203
    %214 = vmatprep.subr.mxu0 0.0
    %215 = vmatpush1.msra.mxu0 %v204
    %216 = vmatprep.subr.mxu0 0.0
    %217 = vmatpush1.msra.mxu0 %v205
    %218 = vmatprep.subr.mxu0 0.0
    %219 = vmatpush1.msra.mxu0 0.0
    %220 = vmatprep.subr.mxu0 0.0
    %221 = vmatpush1.msra.mxu0 0.0
    %222 = vmatprep.subr.mxu0 0.0
    %223 = vmatpush1.msra.mxu0 0.0
    %224 = vmatprep.subr.mxu0 0.0
    %225 = vmatpush1.msra.mxu0 0.0
    %226 = vmatprep.subr.mxu0 0.0
    %227 = vmatpush1.msra.mxu0 0.0
    %228 = vmatprep.subr.mxu0 0.0
    %229 = vmatpush1.msra.mxu0 0.0
    %230 = vmatprep.subr.mxu0 0.0
    %231 = vmatpush1.msra.mxu0 0.0
    %232 = vmatprep.subr.mxu0 0.0
    %233 = vmatpush1.msra.mxu0 0.0
    %234 = vmatprep.subr.mxu0 0.0
    %235 = vmatpush1.msra.mxu0 0.0
    %236 = vmatprep.subr.mxu0 0.0
    %237 = vmatpush1.msra.mxu0 0.0
    %238 = vmatprep.subr.mxu0 0.0
    %239 = vmatpush1.msra.mxu0 0.0
    %240 = vmatprep.subr.mxu0 0.0
    %241 = vmatpush1.msra.mxu0 0.0
    %242 = vmatprep.subr.mxu0 0.0
    %243 = vmatpush1.msra.mxu0 0.0
    %244 = vmatprep.subr.mxu0 0.0
    %245 = vmatpush1.msra.mxu0 0.0
    %246 = vmatprep.subr.mxu0 0.0
    %247 = vmatpush1.msra.mxu0 0.0
    %248 = vmatprep.subr.mxu0 0.0
    %249 = vmatpush1.msra.mxu0 0.0
    %250 = vmatprep.subr.mxu0 0.0
    %251 = vmatpush1.msra.mxu0 0.0
    %252 = vmatprep.subr.mxu0 0.0
    %253 = vmatpush1.msra.mxu0 0.0
    %254 = vmatprep.subr.mxu0 0.0
    %255 = vmatpush1.msra.mxu0 0.0
    %256 = vmatprep.subr.mxu0 0.0
    %257 = vmatpush1.msra.mxu0 0.0
    %258 = vmatprep.subr.mxu0 0.0
    %259 = vmatpush1.msra.mxu0 0.0
    %260 = vmatprep.subr.mxu0 0.0
    %261 = vmatpush1.msra.mxu0 0.0
    %262 = vmatprep.subr.mxu0 0.0
    %263 = vmatpush1.msra.mxu0 0.0
    %264 = vmatprep.subr.mxu0 0.0
    %265 = vmatpush1.msra.mxu0 0.0
    %266 = vmatprep.subr.mxu0 0.0
    %267 = vmatpush1.msra.mxu0 0.0
    %268 = vmatprep.subr.mxu0 0.0
    %269 = vmatpush1.msra.mxu0 0.0
    %270 = vmatprep.subr.mxu0 0.0
    %271 = vmatpush1.msra.mxu0 0.0
    %272 = vmatprep.subr.mxu0 0.0
    %273 = vmatpush1.msra.mxu0 0.0
    %274 = vmatprep.mubr.f32.mxu0 0.0
    %275 = vmatmul.mubr.f32.gmra.mrb[0].mxu0 %v208
    %v276 = vpop.f32.mrb[0].mxu0
    %v277 = vadd.f32 %v206, %v276
    %v278 = vpop.f32.mrb[0].mxu0
    %279 = vdwg.mxu0
    %v280 = vmax.f32 %v277, 0.0
    %v281 = vld [vmem:[#allocation5 + $0x60] sm:$0xff]
    %v282 = vld [vmem:[#allocation5 + $0x68] sm:$0xff]
    %v283 = vld [vmem:[#allocation5 + $0x70] sm:$0xff]
    %v284 = vld [vmem:[#allocation5 + $0x78] sm:$0xff]
    %v285 = vld [vmem:[%s2 + $0x1] sm:$0x1]
    %v287 = vsel %vm49, %v280, 0
    %289 = vmatprep.subr.mxu0 0.0
    %290 = vmatpush1.msra.mxu0 %v281
    %291 = vmatprep.subr.mxu0 0.0
    %292 = vmatpush1.msra.mxu0 %v282
    %293 = vmatprep.subr.mxu0 0.0
    %294 = vmatpush1.msra.mxu0 %v283
    %295 = vmatprep.subr.mxu0 0.0
    %296 = vmatpush1.msra.mxu0 %v284
    %297 = vmatprep.subr.mxu0 0.0
    %298 = vmatpush1.msra.mxu0 0.0
    %299 = vmatprep.subr.mxu0 0.0
    %300 = vmatpush1.msra.mxu0 0.0
    %301 = vmatprep.subr.mxu0 0.0
    %302 = vmatpush1.msra.mxu0 0.0
    %303 = vmatprep.subr.mxu0 0.0
    %304 = vmatpush1.msra.mxu0 0.0
    %305 = vmatprep.subr.mxu0 0.0
    %306 = vmatpush1.msra.mxu0 0.0
    %307 = vmatprep.subr.mxu0 0.0
    %308 = vmatpush1.msra.mxu0 0.0
    %309 = vmatprep.subr.mxu0 0.0
    %310 = vmatpush1.msra.mxu0 0.0
    %311 = vmatprep.subr.mxu0 0.0
    %312 = vmatpush1.msra.mxu0 0.0
    %313 = vmatprep.subr.mxu0 0.0
    %314 = vmatpush1.msra.mxu0 0.0
    %315 = vmatprep.subr.mxu0 0.0
    %316 = vmatpush1.msra.mxu0 0.0
    %317 = vmatprep.subr.mxu0 0.0
    %318 = vmatpush1.msra.mxu0 0.0
    %319 = vmatprep.subr.mxu0 0.0
    %320 = vmatpush1.msra.mxu0 0.0
    %321 = vmatprep.subr.mxu0 0.0
    %322 = vmatpush1.msra.mxu0 0.0
    %323 = vmatprep.subr.mxu0 0.0
    %324 = vmatpush1.msra.mxu0 0.0
    %325 = vmatprep.subr.mxu0 0.0
    %326 = vmatpush1.msra.mxu0 0.0
    %327 = vmatprep.subr.mxu0 0.0
    %328 = vmatpush1.msra.mxu0 0.0
    %329 = vmatprep.subr.mxu0 0.0
    %330 = vmatpush1.msra.mxu0 0.0
    %331 = vmatprep.subr.mxu0 0.0
    %332 = vmatpush1.msra.mxu0 0.0
    %333 = vmatprep.subr.mxu0 0.0
    %334 = vmatpush1.msra.mxu0 0.0
    %335 = vmatprep.subr.mxu0 0.0
    %336 = vmatpush1.msra.mxu0 0.0
    %337 = vmatprep.subr.mxu0 0.0
    %338 = vmatpush1.msra.mxu0 0.0
    %339 = vmatprep.subr.mxu0 0.0
    %340 = vmatpush1.msra.mxu0 0.0
    %341 = vmatprep.subr.mxu0 0.0
    %342 = vmatpush1.msra.mxu0 0.0
    %343 = vmatprep.subr.mxu0 0.0
    %344 = vmatpush1.msra.mxu0 0.0
    %345 = vmatprep.subr.mxu0 0.0
    %346 = vmatpush1.msra.mxu0 0.0
    %347 = vmatprep.subr.mxu0 0.0
    %348 = vmatpush1.msra.mxu0 0.0
    %349 = vmatprep.subr.mxu0 0.0
    %350 = vmatpush1.msra.mxu0 0.0
    %351 = vmatprep.subr.mxu0 0.0
    %352 = vmatpush1.msra.mxu0 0.0
    %353 = vmatprep.mubr.f32.mxu0 0.0
    %354 = vmatmul.mubr.f32.gmra.mrb[0].mxu0 %v287
    %v355 = vpop.f32.mrb[0].mxu0
    %v356 = vadd.f32 %v285, %v355
    %v357 = vpop.f32.mrb[0].mxu0
    %358 = vdwg.mxu0
    %v359 = vmax.f32 %v356, 0.0
    %v360 = vld [vmem:[#allocation5 + $0x80] sm:$0xff]
    %v361 = vld [vmem:[#allocation5 + $0x88] sm:$0xff]
    %v362 = vld [vmem:[#allocation5 + $0x90] sm:$0xff]
    %v363 = vld [vmem:[#allocation5 + $0x98] sm:$0xff]
    %v365 = vsel %vm49, %v359, 0
    %367 = vmatprep.subr.mxu0 0.0
    %368 = vmatpush1.msra.mxu0 %v360
    %369 = vmatprep.subr.mxu0 0.0
    %370 = vmatpush1.msra.mxu0 %v361
    %371 = vmatprep.subr.mxu0 0.0
    %372 = vmatpush1.msra.mxu0 %v362
    %373 = vmatprep.subr.mxu0 0.0
    %374 = vmatpush1.msra.mxu0 %v363
    %375 = vmatprep.subr.mxu0 0.0
    %376 = vmatpush1.msra.mxu0 0.0
    %377 = vmatprep.subr.mxu0 0.0
    %378 = vmatpush1.msra.mxu0 0.0
    %379 = vmatprep.subr.mxu0 0.0
    %380 = vmatpush1.msra.mxu0 0.0
    %381 = vmatprep.subr.mxu0 0.0
    %382 = vmatpush1.msra.mxu0 0.0
    %383 = vmatprep.subr.mxu0 0.0
    %384 = vmatpush1.msra.mxu0 0.0
    %385 = vmatprep.subr.mxu0 0.0
    %386 = vmatpush1.msra.mxu0 0.0
    %387 = vmatprep.subr.mxu0 0.0
    %388 = vmatpush1.msra.mxu0 0.0
    %389 = vmatprep.subr.mxu0 0.0
    %390 = vmatpush1.msra.mxu0 0.0
    %391 = vmatprep.subr.mxu0 0.0
    %392 = vmatpush1.msra.mxu0 0.0
    %393 = vmatprep.subr.mxu0 0.0
    %394 = vmatpush1.msra.mxu0 0.0
    %395 = vmatprep.subr.mxu0 0.0
    %396 = vmatpush1.msra.mxu0 0.0
    %397 = vmatprep.subr.mxu0 0.0
    %398 = vmatpush1.msra.mxu0 0.0
    %399 = vmatprep.subr.mxu0 0.0
    %400 = vmatpush1.msra.mxu0 0.0
    %401 = vmatprep.subr.mxu0 0.0
    %402 = vmatpush1.msra.mxu0 0.0
    %403 = vmatprep.subr.mxu0 0.0
    %404 = vmatpush1.msra.mxu0 0.0
    %405 = vmatprep.subr.mxu0 0.0
    %406 = vmatpush1.msra.mxu0 0.0
    %407 = vmatprep.subr.mxu0 0.0
    %408 = vmatpush1.msra.mxu0 0.0
    %409 = vmatprep.subr.mxu0 0.0
    %410 = vmatpush1.msra.mxu0 0.0
    %411 = vmatprep.subr.mxu0 0.0
    %412 = vmatpush1.msra.mxu0 0.0
    %413 = vmatprep.subr.mxu0 0.0
    %414 = vmatpush1.msra.mxu0 0.0
    %415 = vmatprep.subr.mxu0 0.0
    %416 = vmatpush1.msra.mxu0 0.0
    %417 = vmatprep.subr.mxu0 0.0
    %418 = vmatpush1.msra.mxu0 0.0
    %419 = vmatprep.subr.mxu0 0.0
    %420 = vmatpush1.msra.mxu0 0.0
    %421 = vmatprep.subr.mxu0 0.0
    %422 = vmatpush1.msra.mxu0 0.0
    %423 = vmatprep.subr.mxu0 0.0
    %424 = vmatpush1.msra.mxu0 0.0
    %425 = vmatprep.subr.mxu0 0.0
    %426 = vmatpush1.msra.mxu0 0.0
    %427 = vmatprep.subr.mxu0 0.0
    %428 = vmatpush1.msra.mxu0 0.0
    %429 = vmatprep.subr.mxu0 0.0
    %430 = vmatpush1.msra.mxu0 0.0
    %431 = vmatprep.mubr.f32.mxu0 0.0
    %432 = vmatmul.mubr.f32.gmra.mrb[0].mxu0 %v365
    %v433 = vpop.f32.mrb[0].mxu0
    %v434 = vadd.f32 0.0, %v433
    %v435 = vpop.f32.mrb[0].mxu0
    %436 = vdwg.mxu0
    %v437 = vmax.f32 %v434, 0.0
    %v438 = vld [vmem:[#allocation5 + $0xa0] sm:$0xff]
    %v439 = vld [vmem:[#allocation5 + $0xa8] sm:$0xff]
    %v440 = vld [vmem:[#allocation5 + $0xb0] sm:$0xff]
    %v441 = vld [vmem:[#allocation5 + $0xb8] sm:$0xff]
    %v443 = vsel %vm49, %v437, 0
    %445 = vmatprep.subr.mxu0 0.0
    %446 = vmatpush1.msra.mxu0 %v438
    %447 = vmatprep.subr.mxu0 0.0
    %448 = vmatpush1.msra.mxu0 %v439
    %449 = vmatprep.subr.mxu0 0.0
    %450 = vmatpush1.msra.mxu0 %v440
    %451 = vmatprep.subr.mxu0 0.0
    %452 = vmatpush1.msra.mxu0 %v441
    %453 = vmatprep.subr.mxu0 0.0
    %454 = vmatpush1.msra.mxu0 0.0
    %455 = vmatprep.subr.mxu0 0.0
    %456 = vmatpush1.msra.mxu0 0.0
    %457 = vmatprep.subr.mxu0 0.0
    %458 = vmatpush1.msra.mxu0 0.0
    %459 = vmatprep.subr.mxu0 0.0
    %460 = vmatpush1.msra.mxu0 0.0
    %461 = vmatprep.subr.mxu0 0.0
    %462 = vmatpush1.msra.mxu0 0.0
    %463 = vmatprep.subr.mxu0 0.0
    %464 = vmatpush1.msra.mxu0 0.0
    %465 = vmatprep.subr.mxu0 0.0
    %466 = vmatpush1.msra.mxu0 0.0
    %467 = vmatprep.subr.mxu0 0.0
    %468 = vmatpush1.msra.mxu0 0.0
    %469 = vmatprep.subr.mxu0 0.0
    %470 = vmatpush1.msra.mxu0 0.0
    %471 = vmatprep.subr.mxu0 0.0
    %472 = vmatpush1.msra.mxu0 0.0
    %473 = vmatprep.subr.mxu0 0.0
    %474 = vmatpush1.msra.mxu0 0.0
    %475 = vmatprep.subr.mxu0 0.0
    %476 = vmatpush1.msra.mxu0 0.0
    %477 = vmatprep.subr.mxu0 0.0
    %478 = vmatpush1.msra.mxu0 0.0
    %479 = vmatprep.subr.mxu0 0.0
    %480 = vmatpush1.msra.mxu0 0.0
    %481 = vmatprep.subr.mxu0 0.0
    %482 = vmatpush1.msra.mxu0 0.0
    %483 = vmatprep.subr.mxu0 0.0
    %484 = vmatpush1.msra.mxu0 0.0
    %485 = vmatprep.subr.mxu0 0.0
    %486 = vmatpush1.msra.mxu0 0.0
    %487 = vmatprep.subr.mxu0 0.0
    %488 = vmatpush1.msra.mxu0 0.0
    %489 = vmatprep.subr.mxu0 0.0
    %490 = vmatpush1.msra.mxu0 0.0
    %491 = vmatprep.subr.mxu0 0.0
    %492 = vmatpush1.msra.mxu0 0.0
    %493 = vmatprep.subr.mxu0 0.0
    %494 = vmatpush1.msra.mxu0 0.0
    %495 = vmatprep.subr.mxu0 0.0
    %496 = vmatpush1.msra.mxu0 0.0
    %497 = vmatprep.subr.mxu0 0.0
    %498 = vmatpush1.msra.mxu0 0.0
    %499 = vmatprep.subr.mxu0 0.0
    %500 = vmatpush1.msra.mxu0 0.0
    %501 = vmatprep.subr.mxu0 0.0
    %502 = vmatpush1.msra.mxu0 0.0
    %503 = vmatprep.subr.mxu0 0.0
    %504 = vmatpush1.msra.mxu0 0.0
    %505 = vmatprep.subr.mxu0 0.0
    %506 = vmatpush1.msra.mxu0 0.0
    %507 = vmatprep.subr.mxu0 0.0
    %508 = vmatpush1.msra.mxu0 0.0
    %509 = vmatprep.mubr.f32.mxu0 0.0
    %510 = vmatmul.mubr.f32.gmra.mrb[0].mxu0 %v443
    %v511 = vpop.f32.mrb[0].mxu0
    %v512 = vadd.f32 0.0, %v511
    %v513 = vpop.f32.mrb[0].mxu0
    %514 = vdwg.mxu0
    %v515 = vmax.f32 %v512, 0.0
    %v516 = vadd.f32 %v515, %v42
    %v517 = vld [vmem:[#allocation5 + $0xc0] sm:$0xff]
    %v518 = vld [vmem:[#allocation5 + $0xc8] sm:$0xff]
    %v519 = vld [vmem:[#allocation5 + $0xd0] sm:$0xff]
    %v520 = vld [vmem:[#allocation5 + $0xd8] sm:$0xff]
    %v522 = vsel %vm49, %v516, 0
    %524 = vmatprep.subr.mxu0 0.0
    %525 = vmatpush1.msra.mxu0 %v517
    %526 = vmatprep.subr.mxu0 0.0
    %527 = vmatpush1.msra.mxu0 %v518
    %528 = vmatprep.subr.mxu0 0.0
    %529 = vmatpush1.msra.mxu0 %v519
    %530 = vmatprep.subr.mxu0 0.0
    %531 = vmatpush1.msra.mxu0 %v520
    %532 = vmatprep.subr.mxu0 0.0
    %533 = vmatpush1.msra.mxu0 0.0
    %534 = vmatprep.subr.mxu0 0.0
    %535 = vmatpush1.msra.mxu0 0.0
    %536 = vmatprep.subr.mxu0 0.0
    %537 = vmatpush1.msra.mxu0 0.0
    %538 = vmatprep.subr.mxu0 0.0
    %539 = vmatpush1.msra.mxu0 0.0
    %540 = vmatprep.subr.mxu0 0.0
    %541 = vmatpush1.msra.mxu0 0.0
    %542 = vmatprep.subr.mxu0 0.0
    %543 = vmatpush1.msra.mxu0 0.0
    %544 = vmatprep.subr.mxu0 0.0
    %545 = vmatpush1.msra.mxu0 0.0
    %546 = vmatprep.subr.mxu0 0.0
    %547 = vmatpush1.msra.mxu0 0.0
    %548 = vmatprep.subr.mxu0 0.0
    %549 = vmatpush1.msra.mxu0 0.0
    %550 = vmatprep.subr.mxu0 0.0
    %551 = vmatpush1.msra.mxu0 0.0
    %552 = vmatprep.subr.mxu0 0.0
    %553 = vmatpush1.msra.mxu0 0.0
    %554 = vmatprep.subr.mxu0 0.0
    %555 = vmatpush1.msra.mxu0 0.0
    %556 = vmatprep.subr.mxu0 0.0
    %557 = vmatpush1.msra.mxu0 0.0
    %558 = vmatprep.subr.mxu0 0.0
    %559 = vmatpush1.msra.mxu0 0.0
    %560 = vmatprep.subr.mxu0 0.0
    %561 = vmatpush1.msra.mxu0 0.0
    %562 = vmatprep.subr.mxu0 0.0
    %563 = vmatpush1.msra.mxu0 0.0
    %564 = vmatprep.subr.mxu0 0.0
    %565 = vmatpush1.msra.mxu0 0.0
    %566 = vmatprep.subr.mxu0 0.0
    %567 = vmatpush1.msra.mxu0 0.0
    %568 = vmatprep.subr.mxu0 0.0
    %569 = vmatpush1.msra.mxu0 0.0
    %570 = vmatprep.subr.mxu0 0.0
    %571 = vmatpush1.msra.mxu0 0.0
    %572 = vmatprep.subr.mxu0 0.0
    %573 = vmatpush1.msra.mxu0 0.0
    %574 = vmatprep.subr.mxu0 0.0
    %575 = vmatpush1.msra.mxu0 0.0
    %576 = vmatprep.subr.mxu0 0.0
    %577 = vmatpush1.msra.mxu0 0.0
    %578 = vmatprep.subr.mxu0 0.0
    %579 = vmatpush1.msra.mxu0 0.0
    %580 = vmatprep.subr.mxu0 0.0
    %581 = vmatpush1.msra.mxu0 0.0
    %582 = vmatprep.subr.mxu0 0.0
    %583 = vmatpush1.msra.mxu0 0.0
    %584 = vmatprep.subr.mxu0 0.0
    %585 = vmatpush1.msra.mxu0 0.0
    %586 = vmatprep.subr.mxu0 0.0
    %587 = vmatpush1.msra.mxu0 0.0
    %588 = vmatprep.mubr.f32.mxu0 0.0
    %589 = vmatmul.mubr.f32.gmra.mrb[0].mxu0 %v522
    %v590 = vpop.f32.mrb[0].mxu0
    %v591 = vadd.f32 0.0, %v590
    %v592 = vpop.f32.mrb[0].mxu0
    %593 = vdwg.mxu0
    %v594 = vmax.f32 %v591, 0.0
    %v595 = vld [vmem:[#allocation5 + $0xe0] sm:$0xff]
    %v596 = vld [vmem:[#allocation5 + $0xe8] sm:$0xff]
    %v597 = vld [vmem:[#allocation5 + $0xf0] sm:$0xff]
    %v598 = vld [vmem:[#allocation5 + $0xf8] sm:$0xff]
    %v599 = vld [vmem:[%s2 + $0x2] sm:$0x1]
    %v601 = vsel %vm49, %v594, 0
    %603 = vmatprep.subr.mxu0 0.0
    %604 = vmatpush1.msra.mxu0 %v595
    %605 = vmatprep.subr.mxu0 0.0
    %606 = vmatpush1.msra.mxu0 %v596
    %607 = vmatprep.subr.mxu0 0.0
    %608 = vmatpush1.msra.mxu0 %v597
    %609 = vmatprep.subr.mxu0 0.0
    %610 = vmatpush1.msra.mxu0 %v598
    %611 = vmatprep.subr.mxu0 0.0
    %612 = vmatpush1.msra.mxu0 0.0
    %613 = vmatprep.subr.mxu0 0.0
    %614 = vmatpush1.msra.mxu0 0.0
    %615 = vmatprep.subr.mxu0 0.0
    %616 = vmatpush1.msra.mxu0 0.0
    %617 = vmatprep.subr.mxu0 0.0
    %618 = vmatpush1.msra.mxu0 0.0
    %619 = vmatprep.subr.mxu0 0.0
    %620 = vmatpush1.msra.mxu0 0.0
    %621 = vmatprep.subr.mxu0 0.0
    %622 = vmatpush1.msra.mxu0 0.0
    %623 = vmatprep.subr.mxu0 0.0
    %624 = vmatpush1.msra.mxu0 0.0
    %625 = vmatprep.subr.mxu0 0.0
    %626 = vmatpush1.msra.mxu0 0.0
    %627 = vmatprep.subr.mxu0 0.0
    %628 = vmatpush1.msra.mxu0 0.0
    %629 = vmatprep.subr.mxu0 0.0
    %630 = vmatpush1.msra.mxu0 0.0
    %631 = vmatprep.subr.mxu0 0.0
    %632 = vmatpush1.msra.mxu0 0.0
    %633 = vmatprep.subr.mxu0 0.0
    %634 = vmatpush1.msra.mxu0 0.0
    %635 = vmatprep.subr.mxu0 0.0
    %636 = vmatpush1.msra.mxu0 0.0
    %637 = vmatprep.subr.mxu0 0.0
    %638 = vmatpush1.msra.mxu0 0.0
    %639 = vmatprep.subr.mxu0 0.0
    %640 = vmatpush1.msra.mxu0 0.0
    %641 = vmatprep.subr.mxu0 0.0
    %642 = vmatpush1.msra.mxu0 0.0
    %643 = vmatprep.subr.mxu0 0.0
    %644 = vmatpush1.msra.mxu0 0.0
    %645 = vmatprep.subr.mxu0 0.0
    %646 = vmatpush1.msra.mxu0 0.0
    %647 = vmatprep.subr.mxu0 0.0
    %648 = vmatpush1.msra.mxu0 0.0
    %649 = vmatprep.subr.mxu0 0.0
    %650 = vmatpush1.msra.mxu0 0.0
    %651 = vmatprep.subr.mxu0 0.0
    %652 = vmatpush1.msra.mxu0 0.0
    %653 = vmatprep.subr.mxu0 0.0
    %654 = vmatpush1.msra.mxu0 0.0
    %655 = vmatprep.subr.mxu0 0.0
    %656 = vmatpush1.msra.mxu0 0.0
    %657 = vmatprep.subr.mxu0 0.0
    %658 = vmatpush1.msra.mxu0 0.0
    %659 = vmatprep.subr.mxu0 0.0
    %660 = vmatpush1.msra.mxu0 0.0
    %661 = vmatprep.subr.mxu0 0.0
    %662 = vmatpush1.msra.mxu0 0.0
    %663 = vmatprep.subr.mxu0 0.0
    %664 = vmatpush1.msra.mxu0 0.0
    %665 = vmatprep.subr.mxu0 0.0
    %666 = vmatpush1.msra.mxu0 0.0
    %667 = vmatprep.mubr.f32.mxu0 0.0
    %668 = vmatmul.mubr.f32.gmra.mrb[0].mxu0 %v601
    %v669 = vpop.f32.mrb[0].mxu0
    %v670 = vadd.f32 %v599, %v669
    %v671 = vpop.f32.mrb[0].mxu0
    %672 = vdwg.mxu0
    %v673 = vmax.f32 %v670, 0.0
    %674 = vrot.lane.b32.xlu0 %v43, 16
    %v675 = vpop.permute.xlu0 %674
    %v676 = vadd.f32 %v673, %v675
    %v677 = vld [vmem:[#allocation5 + $0x100] sm:$0xff]
    %v678 = vld [vmem:[#allocation5 + $0x108] sm:$0xff]
    %v679 = vld [vmem:[#allocation5 + $0x110] sm:$0xff]
    %v680 = vld [vmem:[#allocation5 + $0x118] sm:$0xff]
    %v681 = vld [vmem:[%s2 + $0x3] sm:$0x1]
    %v683 = vsel %vm49, %v676, 0
    %685 = vmatprep.subr.mxu0 0.0
    %686 = vmatpush1.msra.mxu0 %v677
    %687 = vmatprep.subr.mxu0 0.0
    %688 = vmatpush1.msra.mxu0 %v678
    %689 = vmatprep.subr.mxu0 0.0
    %690 = vmatpush1.msra.mxu0 %v679
    %691 = vmatprep.subr.mxu0 0.0
    %692 = vmatpush1.msra.mxu0 %v680
    %693 = vmatprep.subr.mxu0 0.0
    %694 = vmatpush1.msra.mxu0 0.0
    %695 = vmatprep.subr.mxu0 0.0
    %696 = vmatpush1.msra.mxu0 0.0
    %697 = vmatprep.subr.mxu0 0.0
    %698 = vmatpush1.msra.mxu0 0.0
    %699 = vmatprep.subr.mxu0 0.0
    %700 = vmatpush1.msra.mxu0 0.0
    %701 = vmatprep.subr.mxu0 0.0
    %702 = vmatpush1.msra.mxu0 0.0
    %703 = vmatprep.subr.mxu0 0.0
    %704 = vmatpush1.msra.mxu0 0.0
    %705 = vmatprep.subr.mxu0 0.0
    %706 = vmatpush1.msra.mxu0 0.0
    %707 = vmatprep.subr.mxu0 0.0
    %708 = vmatpush1.msra.mxu0 0.0
    %709 = vmatprep.subr.mxu0 0.0
    %710 = vmatpush1.msra.mxu0 0.0
    %711 = vmatprep.subr.mxu0 0.0
    %712 = vmatpush1.msra.mxu0 0.0
    %713 = vmatprep.subr.mxu0 0.0
    %714 = vmatpush1.msra.mxu0 0.0
    %715 = vmatprep.subr.mxu0 0.0
    %716 = vmatpush1.msra.mxu0 0.0
    %717 = vmatprep.subr.mxu0 0.0
    %718 = vmatpush1.msra.mxu0 0.0
    %719 = vmatprep.subr.mxu0 0.0
    %720 = vmatpush1.msra.mxu0 0.0
    %721 = vmatprep.subr.mxu0 0.0
    %722 = vmatpush1.msra.mxu0 0.0
    %723 = vmatprep.subr.mxu0 0.0
    %724 = vmatpush1.msra.mxu0 0.0
    %725 = vmatprep.subr.mxu0 0.0
    %726 = vmatpush1.msra.mxu0 0.0
    %727 = vmatprep.subr.mxu0 0.0
    %728 = vmatpush1.msra.mxu0 0.0
    %729 = vmatprep.subr.mxu0 0.0
    %730 = vmatpush1.msra.mxu0 0.0
    %731 = vmatprep.subr.mxu0 0.0
    %732 = vmatpush1.msra.mxu0 0.0
    %733 = vmatprep.subr.mxu0 0.0
    %734 = vmatpush1.msra.mxu0 0.0
    %735 = vmatprep.subr.mxu0 0.0
    %736 = vmatpush1.msra.mxu0 0.0
    %737 = vmatprep.subr.mxu0 0.0
    %738 = vmatpush1.msra.mxu0 0.0
    %739 = vmatprep.subr.mxu0 0.0
    %740 = vmatpush1.msra.mxu0 0.0
    %741 = vmatprep.subr.mxu0 0.0
    %742 = vmatpush1.msra.mxu0 0.0
    %743 = vmatprep.subr.mxu0 0.0
    %744 = vmatpush1.msra.mxu0 0.0
    %745 = vmatprep.subr.mxu0 0.0
    %746 = vmatpush1.msra.mxu0 0.0
    %747 = vmatprep.subr.mxu0 0.0
    %748 = vmatpush1.msra.mxu0 0.0
    %749 = vmatprep.mubr.f32.mxu0 0.0
    %750 = vmatmul.mubr.f32.gmra.mrb[0].mxu0 %v683
    %v751 = vpop.f32.mrb[0].mxu0
    %v752 = vadd.f32 %v681, %v751
    %v753 = vpop.f32.mrb[0].mxu0
    %754 = vdwg.mxu0
    %v755 = vlaneseq
    %v756 = vand.u32 %v755, 127
    %vm757 = vcmp.ge.s32.totalorder %v756, 32
    %vm758 = vcmp.lt.s32.totalorder %v756, 48
    %vm759 = vmand %vm757, %vm758
    %v760 = vtanh.pop %v752
    %v761 = vmul.f32 %v760, 0.5
    %v762 = vadd.f32 %v761, 0.5
    %v763 = vsel %vm759, %v760, %v762
    %764 = vrot.lane.b32.xlu0 %v763, 112
    %v765 = vpop.permute.xlu0 %764
    %766 = vrot.lane.b32.xlu0 %v763, 96
    %v767 = vpop.permute.xlu0 %766
    %768 = vrot.lane.b32.xlu0 %v763, 80
    %v769 = vpop.permute.xlu0 %768
    %vm770 = vcmp.lt.s32.totalorder %v756, 16
    %v771 = vmul.f32 %v765, %v44
    %v772 = vmul.f32 %v763, %v767
    %v773 = vadd.f32 %v771, %v772
    %v774 = vsel %vm770, %v773, 0.0
    %v775 = vtanh.pop %v774
    %v776 = vmul.f32 %v769, %v775
    %v777 = vsel %vm770, %v776, 0.0
    %v778 = vld [vmem:[#allocation5 + $0x120] sm:$0xff]
    %v779 = vld [vmem:[#allocation5 + $0x128] sm:$0xff]
    %v780 = vld [vmem:[#allocation5 + $0x130] sm:$0xff]
    %v781 = vld [vmem:[#allocation5 + $0x138] sm:$0xff]
    %v782 = vld [vmem:[%s2 + $0x4] sm:$0x1]
    %v784 = vsel %vm49, %v777, 0
    %786 = vmatprep.subr.mxu0 0.0
    %787 = vmatpush1.msra.mxu0 %v778
    %788 = vmatprep.subr.mxu0 0.0
    %789 = vmatpush1.msra.mxu0 %v779
    %790 = vmatprep.subr.mxu0 0.0
    %791 = vmatpush1.msra.mxu0 %v780
    %792 = vmatprep.subr.mxu0 0.0
    %793 = vmatpush1.msra.mxu0 %v781
    %794 = vmatprep.subr.mxu0 0.0
    %795 = vmatpush1.msra.mxu0 0.0
    %796 = vmatprep.subr.mxu0 0.0
    %797 = vmatpush1.msra.mxu0 0.0
    %798 = vmatprep.subr.mxu0 0.0
    %799 = vmatpush1.msra.mxu0 0.0
    %800 = vmatprep.subr.mxu0 0.0
    %801 = vmatpush1.msra.mxu0 0.0
    %802 = vmatprep.subr.mxu0 0.0
    %803 = vmatpush1.msra.mxu0 0.0
    %804 = vmatprep.subr.mxu0 0.0
    %805 = vmatpush1.msra.mxu0 0.0
    %806 = vmatprep.subr.mxu0 0.0
    %807 = vmatpush1.msra.mxu0 0.0
    %808 = vmatprep.subr.mxu0 0.0
    %809 = vmatpush1.msra.mxu0 0.0
    %810 = vmatprep.subr.mxu0 0.0
    %811 = vmatpush1.msra.mxu0 0.0
    %812 = vmatprep.subr.mxu0 0.0
    %813 = vmatpush1.msra.mxu0 0.0
    %814 = vmatprep.subr.mxu0 0.0
    %815 = vmatpush1.msra.mxu0 0.0
    %816 = vmatprep.subr.mxu0 0.0
    %817 = vmatpush1.msra.mxu0 0.0
    %818 = vmatprep.subr.mxu0 0.0
    %819 = vmatpush1.msra.mxu0 0.0
    %820 = vmatprep.subr.mxu0 0.0
    %821 = vmatpush1.msra.mxu0 0.0
    %822 = vmatprep.subr.mxu0 0.0
    %823 = vmatpush1.msra.mxu0 0.0
    %824 = vmatprep.subr.mxu0 0.0
    %825 = vmatpush1.msra.mxu0 0.0
    %826 = vmatprep.subr.mxu0 0.0
    %827 = vmatpush1.msra.mxu0 0.0
    %828 = vmatprep.subr.mxu0 0.0
    %829 = vmatpush1.msra.mxu0 0.0
    %830 = vmatprep.subr.mxu0 0.0
    %831 = vmatpush1.msra.mxu0 0.0
    %832 = vmatprep.subr.mxu0 0.0
    %833 = vmatpush1.msra.mxu0 0.0
    %834 = vmatprep.subr.mxu0 0.0
    %835 = vmatpush1.msra.mxu0 0.0
    %836 = vmatprep.subr.mxu0 0.0
    %837 = vmatpush1.msra.mxu0 0.0
    %838 = vmatprep.subr.mxu0 0.0
    %839 = vmatpush1.msra.mxu0 0.0
    %840 = vmatprep.subr.mxu0 0.0
    %841 = vmatpush1.msra.mxu0 0.0
    %842 = vmatprep.subr.mxu0 0.0
    %843 = vmatpush1.msra.mxu0 0.0
    %844 = vmatprep.subr.mxu0 0.0
    %845 = vmatpush1.msra.mxu0 0.0
    %846 = vmatprep.subr.mxu0 0.0
    %847 = vmatpush1.msra.mxu0 0.0
    %848 = vmatprep.subr.mxu0 0.0
    %849 = vmatpush1.msra.mxu0 0.0
    %850 = vmatprep.mubr.f32.mxu0 0.0
    %851 = vmatmul.mubr.f32.gmra.mrb[0].mxu0 %v784
    %v852 = vpop.f32.mrb[0].mxu0
    %v853 = vadd.f32 %v782, %v852
    %v854 = vpop.f32.mrb[0].mxu0
    %855 = vdwg.mxu0
    %v856 = vmax.f32 %v853, 0.0
    %v857 = vld [vmem:[#allocation5 + $0x140] sm:$0xff]
    %v858 = vld [vmem:[#allocation5 + $0x148] sm:$0xff]
    %v859 = vld [vmem:[#allocation5 + $0x150] sm:$0xff]
    %v860 = vld [vmem:[#allocation5 + $0x158] sm:$0xff]
    %v862 = vsel %vm49, %v856, 0
    %864 = vmatprep.subr.mxu0 0.0
    %865 = vmatpush1.msra.mxu0 %v857
    %866 = vmatprep.subr.mxu0 0.0
    %867 = vmatpush1.msra.mxu0 %v858
    %868 = vmatprep.subr.mxu0 0.0
    %869 = vmatpush1.msra.mxu0 %v859
    %870 = vmatprep.subr.mxu0 0.0
    %871 = vmatpush1.msra.mxu0 %v860
    %872 = vmatprep.subr.mxu0 0.0
    %873 = vmatpush1.msra.mxu0 0.0
    %874 = vmatprep.subr.mxu0 0.0
    %875 = vmatpush1.msra.mxu0 0.0
    %876 = vmatprep.subr.mxu0 0.0
    %877 = vmatpush1.msra.mxu0 0.0
    %878 = vmatprep.subr.mxu0 0.0
    %879 = vmatpush1.msra.mxu0 0.0
    %880 = vmatprep.subr.mxu0 0.0
    %881 = vmatpush1.msra.mxu0 0.0
    %882 = vmatprep.subr.mxu0 0.0
    %883 = vmatpush1.msra.mxu0 0.0
    %884 = vmatprep.subr.mxu0 0.0
    %885 = vmatpush1.msra.mxu0 0.0
    %886 = vmatprep.subr.mxu0 0.0
    %887 = vmatpush1.msra.mxu0 0.0
    %888 = vmatprep.subr.mxu0 0.0
    %889 = vmatpush1.msra.mxu0 0.0
    %890 = vmatprep.subr.mxu0 0.0
    %891 = vmatpush1.msra.mxu0 0.0
    %892 = vmatprep.subr.mxu0 0.0
    %893 = vmatpush1.msra.mxu0 0.0
    %894 = vmatprep.subr.mxu0 0.0
    %895 = vmatpush1.msra.mxu0 0.0
    %896 = vmatprep.subr.mxu0 0.0
    %897 = vmatpush1.msra.mxu0 0.0
    %898 = vmatprep.subr.mxu0 0.0
    %899 = vmatpush1.msra.mxu0 0.0
    %900 = vmatprep.subr.mxu0 0.0
    %901 = vmatpush1.msra.mxu0 0.0
    %902 = vmatprep.subr.mxu0 0.0
    %903 = vmatpush1.msra.mxu0 0.0
    %904 = vmatprep.subr.mxu0 0.0
    %905 = vmatpush1.msra.mxu0 0.0
    %906 = vmatprep.subr.mxu0 0.0
    %907 = vmatpush1.msra.mxu0 0.0
    %908 = vmatprep.subr.mxu0 0.0
    %909 = vmatpush1.msra.mxu0 0.0
    %910 = vmatprep.subr.mxu0 0.0
    %911 = vmatpush1.msra.mxu0 0.0
    %912 = vmatprep.subr.mxu0 0.0
    %913 = vmatpush1.msra.mxu0 0.0
    %914 = vmatprep.subr.mxu0 0.0
    %915 = vmatpush1.msra.mxu0 0.0
    %916 = vmatprep.subr.mxu0 0.0
    %917 = vmatpush1.msra.mxu0 0.0
    %918 = vmatprep.subr.mxu0 0.0
    %919 = vmatpush1.msra.mxu0 0.0
    %920 = vmatprep.subr.mxu0 0.0
    %921 = vmatpush1.msra.mxu0 0.0
    %922 = vmatprep.subr.mxu0 0.0
    %923 = vmatpush1.msra.mxu0 0.0
    %924 = vmatprep.subr.mxu0 0.0
    %925 = vmatpush1.msra.mxu0 0.0
    %926 = vmatprep.subr.mxu0 0.0
    %927 = vmatpush1.msra.mxu0 0.0
    %928 = vmatprep.mubr.f32.mxu0 0.0
    %929 = vmatmul.mubr.f32.gmra.mrb[0].mxu0 %v862
    %v930 = vpop.f32.mrb[0].mxu0
    %v931 = vadd.f32 0.0, %v930
    %v932 = vpop.f32.mrb[0].mxu0
    %933 = vdwg.mxu0
    %v935 = vrot.slane %v931, 7
    %v937 = vrot.slane %v777, 6
    %v940 = vrot.slane %v774, 5
    %v943 = vrot.slane %v673, 4
    %vm945 = vcmask 1040384
    %v946 = vsel %vm945, 1.0, %v935
    %vm947 = vcmask 1041408
    %v948 = vsel %vm947, %v946, %v937
    %vm949 = vcmask 1042432
    %v950 = vsel %vm949, %v948, %v940
    %vm951 = vcmask 1043456
    %v952 = vsel %vm951, %v950, %v943
    %vm953 = vcmask 1044480
    %v954 = vsel %vm953, %v952, 0.0
    %955 = vst [vmem:[#allocation7] sm:$0xff] %v954
    // Predicated region
    $region22: #{actor_critic_step.1} parent=1 // pred_check
      _
    $region23: #{actor_critic_step.1} parent=1 // pred_check_branch
      %957 = sbr.rel (0) target = $region25
    $region24: #{actor_critic_step.1} parent=1 // pred_region
      %s959 = ssub.s32 128, 128
      %960 = vsyncadd [#allocation4], %s959
      %s962 = sshll.u32 [#allocation7], 4
      %s963 = int_to_ptr.vmem [resolvable:$true] %s962
      %965 = dma.vmem_to_hbm [thread:$0]  %s963, 128, %s3, [#allocation4]
    $region25: #{actor_critic_step.1} parent=1 // pred_fallthru
      _
    // Predicated region
    $region26: #{actor_critic_step.1} parent=1 // pred_check
      _
    $region27: #{actor_critic_step.1} parent=1 // pred_check_branch
      %967 = sbr.rel (0) target = $region29
    $region28: #{actor_critic_step.1} parent=1 // pred_region
      %968 = dma.done [#allocation4], 128
    $region29: #{actor_critic_step.1} parent=1 // pred_fallthru
      _
    %969 = vsyncpa [#allocation3], 1
    %970 = vsyncpa [#allocation6], 1
    %971 = vsyncpa [#allocation4], 1

</llo_original>
